<compile_context>
chip_gen: v7x
topology: tpu7x:2x2x1
jax: 0.10.0
libtpu: 0.0.40
codegen_flags: <defaults>
</compile_context>

<pallas_src>
import jax
import jax.numpy as jnp
from jax import lax
from jax.experimental import pallas as pl
from jax.experimental.pallas import tpu as pltpu


def simple_model_kernel(ids_ref, emb_ref, w_ref, b_ref, out_ref):
    # ids_ref : VMEM [TB, S]     int32  (one batch tile of token ids)
    # emb_ref : VMEM [V, H]      f32    (embedding table, resident)
    # w_ref   : VMEM [H, Op]     f32    (fc weight, [in, out] layout, lane-padded)
    # b_ref   : VMEM [1, Op]     f32    (fc bias, lane-padded)
    # out_ref : VMEM [TB, Op]    f32    (one batch tile of the output)
    TB, S = ids_ref.shape
    V, _ = emb_ref.shape

    ids = ids_ref[...]                                              # [TB, S]

    # Vectorized one-hot: vocab on sublanes, sequence on lanes, so the ids
    # (S already on lanes) only need a sublane broadcast and the sequence
    # reduction is a last-axis (lane) reduce — cheapest supported path.
    v_iota = lax.broadcasted_iota(jnp.int32, (TB, V, S), 1)
    onehot = (ids[:, None, :] == v_iota).astype(jnp.float32)        # [TB, V, S]
    counts = jnp.sum(onehot, axis=-1) * jnp.float32(1.0 / S)        # [TB, V]

    # Mean embedding: [TB, V] @ [V, H]  (S-fold fewer MXU flops than gathering
    # every token row first).
    mean_emb = jnp.dot(counts, emb_ref[...],
                       preferred_element_type=jnp.float32)          # [TB, H]

    # Final linear: [TB, H] @ [H, Op] + bias -> lane-dense store.
    out = jnp.dot(mean_emb, w_ref[...],
                  preferred_element_type=jnp.float32) + b_ref[...]
    out_ref[...] = out.astype(out_ref.dtype)


def simple_model_forward(ids, emb_table, fc_weight, fc_bias, *, batch_tile=8):
    """ids: [B, S] int; emb_table: [V, H]; fc_weight: [H, O]; fc_bias: [O]."""
    B, S = ids.shape
    V, H = emb_table.shape
    O = fc_weight.shape[1]
    O_pad = pl.cdiv(O, 128) * 128             # lane-dense output block width

    TB = batch_tile
    B_pad = pl.cdiv(B, TB) * TB               # pad batch so every tile is (TB, .)
    grid = (B_pad // TB,)

    ids_p = jnp.zeros((B_pad, S), jnp.int32).at[:B].set(ids.astype(jnp.int32))
    emb = emb_table.astype(jnp.float32)
    w_pad = jnp.zeros((H, O_pad), jnp.float32).at[:, :O].set(
        fc_weight.astype(jnp.float32))
    b_pad = jnp.zeros((1, O_pad), jnp.float32).at[:, :O].set(
        fc_bias.reshape(1, O).astype(jnp.float32))

    # TODO(synk): for large vocabularies the resident [V, H] table should become
    # a per-row DMA gather driven by scalar-prefetched ids (v7x has only 64 MiB
    # VMEM); at V=32 the whole table is 16 KiB so it stays resident.
    grid_spec = pltpu.PrefetchScalarGridSpec(
        num_scalar_prefetch=0,
        grid=grid,
        in_specs=[
            pl.BlockSpec((TB, S), lambda i: (i, 0)),          # token ids tile
            pl.BlockSpec((V, H), lambda i: (0, 0)),           # embedding table
            pl.BlockSpec((H, O_pad), lambda i: (0, 0)),       # fc weight (padded)
            pl.BlockSpec((1, O_pad), lambda i: (0, 0)),       # fc bias (padded)
        ],
        out_specs=pl.BlockSpec((TB, O_pad), lambda i: (i, 0)),
    )

    out_pad = pl.pallas_call(
        simple_model_kernel,
        out_shape=jax.ShapeDtypeStruct((B_pad, O_pad), jnp.float32),
        grid_spec=grid_spec,
        compiler_params=pltpu.CompilerParams(
            dimension_semantics=("parallel",)),
    )(ids_p, emb, w_pad, b_pad)

    return out_pad[:B, :O]


def reference_forward(ids, emb_table, fc_weight, fc_bias):
    emb = emb_table[ids]                  # [B, S, H]
    mean = emb.mean(axis=1)               # [B, H]
    return mean @ fc_weight + fc_bias     # [B, O]


if __name__ == "__main__":
    # Shapes consistent with the module: vocab (input_size)=32, hidden=128
    # (fixed by nn.Embedding(input_size, 128)), output_size=16, batch=2, seq=8.
    VOCAB, HIDDEN, OUT = 32, 128, 16
    B, S = 2, 8

    key = jax.random.PRNGKey(0)
    k_ids, k_emb, k_w, k_b = jax.random.split(key, 4)

    # Deterministic parameter init (mimics PyTorch defaults: N(0,1) embedding,
    # uniform(-1/sqrt(H), 1/sqrt(H)) for Linear weight/bias, stored [in, out]).
    emb_table = jax.random.normal(k_emb, (VOCAB, HIDDEN), dtype=jnp.float32)
    bound = 1.0 / (HIDDEN ** 0.5)
    fc_weight = jax.random.uniform(k_w, (HIDDEN, OUT), minval=-bound,
                                   maxval=bound, dtype=jnp.float32)
    fc_bias = jax.random.uniform(k_b, (OUT,), minval=-bound,
                                 maxval=bound, dtype=jnp.float32)

    ids = jax.random.randint(k_ids, (B, S), 0, VOCAB, dtype=jnp.int32)

    out = simple_model_forward(ids, emb_table, fc_weight, fc_bias)
    out = jax.block_until_ready(out)

    ref = reference_forward(ids, emb_table, fc_weight, fc_bias)
    assert out.shape == (B, OUT)
    assert jnp.allclose(out, ref, atol=1e-4, rtol=1e-4), "mismatch vs reference"

    print("KERNEL_OK")
</pallas_src>

<mosaic_0001>
module attributes {stable_mosaic.version = 11 : i64} {
  func.func @simple_model_kernel(%arg0: i32, %arg1: memref<8x8xi32, #tpu.memory_space<vmem>>, %arg2: memref<32x128xf32, #tpu.memory_space<vmem>>, %arg3: memref<128x128xf32, #tpu.memory_space<vmem>>, %arg4: memref<1x128xf32, #tpu.memory_space<vmem>>, %arg5: memref<8x128xf32, #tpu.memory_space<vmem>>) attributes {dimension_semantics = [#tpu.dimension_semantics<parallel>], iteration_bounds = array<i64: 1>, scalar_prefetch = 0 : i64, scratch_operands = 0 : i64, tpu.core_type = #tpu.core_type<tc>, window_params = [{transform_indices = @transform_0, window_bounds = array<i64: 8, 8>}, {pipeline_mode = #tpu.pipeline_mode<synchronous>, transform_indices = @transform_1, window_bounds = array<i64: 32, 128>}, {pipeline_mode = #tpu.pipeline_mode<synchronous>, transform_indices = @transform_2, window_bounds = array<i64: 128, 128>}, {pipeline_mode = #tpu.pipeline_mode<synchronous>, transform_indices = @transform_3, window_bounds = array<i64: 1, 128>}, {transform_indices = @transform_4, window_bounds = array<i64: 8, 128>}]} {
    %c0 = arith.constant 0 : index
    %c0_0 = arith.constant 0 : index
    %0 = vector.load %arg1[%c0, %c0_0] : memref<8x8xi32, #tpu.memory_space<vmem>>, vector<8x8xi32>
    %1 = tpu.iota {dimensions = array<i32: 1>} : vector<8x32x8xi32>
    %2 = vector.shape_cast %0 : vector<8x8xi32> to vector<8x1x8xi32>
    %3 = vector.broadcast %2 : vector<8x1x8xi32> to vector<8x32x8xi32>
    %4 = arith.cmpi eq, %3, %1 : vector<8x32x8xi32>
    %5 = arith.extui %4 : vector<8x32x8xi1> to vector<8x32x8xi32>
    %6 = arith.sitofp %5 : vector<8x32x8xi32> to vector<8x32x8xf32>
    %cst = arith.constant dense<0.000000e+00> : vector<8x32xf32>
    %7 = vector.multi_reduction <add>, %6, %cst [2] : vector<8x32x8xf32> to vector<8x32xf32>
    %cst_1 = arith.constant 1.250000e-01 : f32
    %8 = vector.broadcast %cst_1 : f32 to vector<8x32xf32>
    %9 = arith.mulf %7, %8 : vector<8x32xf32>
    %c0_2 = arith.constant 0 : index
    %c0_3 = arith.constant 0 : index
    %10 = vector.load %arg2[%c0_2, %c0_3] : memref<32x128xf32, #tpu.memory_space<vmem>>, vector<32x128xf32>
    %cst_4 = arith.constant dense<0.000000e+00> : vector<8x128xf32>
    %11 = tpu.matmul %9, %10, %cst_4 {dimension_numbers = #tpu.dot_dimension_numbers<[1], [0], [0], [1], [0, 0, 1, 1], [], []>} : vector<8x32xf32>, vector<32x128xf32>, vector<8x128xf32> -> vector<8x128xf32>
    %c0_5 = arith.constant 0 : index
    %c0_6 = arith.constant 0 : index
    %12 = vector.load %arg3[%c0_5, %c0_6] : memref<128x128xf32, #tpu.memory_space<vmem>>, vector<128x128xf32>
    %cst_7 = arith.constant dense<0.000000e+00> : vector<8x128xf32>
    %13 = tpu.matmul %11, %12, %cst_7 {dimension_numbers = #tpu.dot_dimension_numbers<[1], [0], [0], [1], [0, 0, 1, 1], [], []>} : vector<8x128xf32>, vector<128x128xf32>, vector<8x128xf32> -> vector<8x128xf32>
    %c0_8 = arith.constant 0 : index
    %c0_9 = arith.constant 0 : index
    %14 = vector.load %arg4[%c0_8, %c0_9] : memref<1x128xf32, #tpu.memory_space<vmem>>, vector<1x128xf32>
    %15 = vector.broadcast %14 : vector<1x128xf32> to vector<8x128xf32>
    %16 = arith.addf %13, %15 : vector<8x128xf32>
    %c0_10 = arith.constant 0 : index
    %c0_11 = arith.constant 0 : index
    %17 = vector.load %arg5[%c0_10, %c0_11] : memref<8x128xf32, #tpu.memory_space<vmem>>, vector<8x128xf32>
    tpu.vector_store %arg5[%c0_10, %c0_11], %16 {strides = array<i32>} : memref<8x128xf32, #tpu.memory_space<vmem>>, vector<8x128xf32>,
    return
  }
  func.func @transform_0(%arg0: i32) -> (i32, i32) {
    %c0_i32 = arith.constant 0 : i32
    %c0_i32_0 = arith.constant 0 : i32
    return %arg0, %c0_i32 : i32, i32
  }
  func.func @transform_1(%arg0: i32) -> (i32, i32) {
    %c0_i32 = arith.constant 0 : i32
    %c0_i32_0 = arith.constant 0 : i32
    %c0_i32_1 = arith.constant 0 : i32
    return %c0_i32, %c0_i32_0 : i32, i32
  }
  func.func @transform_2(%arg0: i32) -> (i32, i32) {
    %c0_i32 = arith.constant 0 : i32
    %c0_i32_0 = arith.constant 0 : i32
    %c0_i32_1 = arith.constant 0 : i32
    return %c0_i32, %c0_i32_0 : i32, i32
  }
  func.func @transform_3(%arg0: i32) -> (i32, i32) {
    %c0_i32 = arith.constant 0 : i32
    %c0_i32_0 = arith.constant 0 : i32
    %c0_i32_1 = arith.constant 0 : i32
    return %c0_i32, %c0_i32_0 : i32, i32
  }
  func.func @transform_4(%arg0: i32) -> (i32, i32) {
    %c0_i32 = arith.constant 0 : i32
    %c0_i32_0 = arith.constant 0 : i32
    return %arg0, %c0_i32 : i32, i32
  }
}

</mosaic_0001>

<llo_original>
// kernel: tpu_custom_call.1
$region0: #{tpu_custom_call.1}
  #allocation0 [shape = 'u32[]', space=smem, size = 0x4, offset = 0x4, fixed_abs, tag = 'smem constant byte address 0x4 - core index']
  #allocation1 [shape = 'u32[144,128]{1,0:T(1,128)}', space=vmem, size = 0x12000, scoped, tag = 'internal scratch']
  %s0 = inlined_call_operand.hbm [shape: s32[8,8], index: 0, kind: input, shape index: {}]
  %s1 = inlined_call_operand.hbm [shape: f32[32,128], index: 1, kind: input, shape index: {}]
  %s2 = inlined_call_operand.hbm [shape: f32[128,128], index: 2, kind: input, shape index: {}]
  %s3 = inlined_call_operand.vmem [shape: f32[1,128], index: 3, kind: input, shape index: {}]
  %s4 = inlined_call_operand.hbm [shape: f32[8,128], index: 4, kind: output, shape index: {}]
  %s5 = sld [smem:[#allocation0]]
  $region38: #{tpu_custom_call.1} parent=0
    _
  %s7 = ssub.s32 1, %s5
  %s8 = scalar_select 0, %s7, %s5
  $region1: #{tpu_custom_call.1} parent=0
    #allocation2 [shape = 'u8[4096]{0}', space=vmem, size = 0x1000, scoped, tag = 'input window, operand 0, single buffered']
    #allocation3 [shape = 's32[1]{0}', space=sflag, size = 0x4, scoped, tag = 'scoped memory for tpu_custom_call.1']
    #allocation4 [shape = 's32[1]{0}', space=sflag, size = 0x4, scoped, tag = 'scoped memory for tpu_custom_call.1']
    #allocation5 [shape = 'u8[16384]{0}', space=vmem, size = 0x4000, scoped, tag = 'input window, operand 1, single buffered']
    #allocation6 [shape = 's32[1]{0}', space=sflag, size = 0x4, scoped, tag = 'scoped memory for tpu_custom_call.1']
    #allocation7 [shape = 'u8[65536]{0}', space=vmem, size = 0x10000, scoped, tag = 'input window, operand 2, single buffered']
    #allocation8 [shape = 'u8[4096]{0}', space=vmem, size = 0x1000, scoped, tag = 'output window, operand 0, single buffered']
    %9 = vsyncpa [#allocation3], 0
    %10 = vsyncpa [#allocation6], 0
    %11 = vsyncpa [#allocation4], 0
    // Predicated region
    $region2: #{tpu_custom_call.1} parent=1 // pred_check
      _
    $region3: #{tpu_custom_call.1} parent=1 // pred_check_branch
      %13 = sbr.rel (0) target = $region5
    $region4: #{tpu_custom_call.1} parent=1 // pred_region
      %s15 = ssub.s32 128, 128
      %16 = vsyncadd [#allocation3], %s15
      %s18 = sshll.u32 [#allocation2], 4
      %s19 = int_to_ptr.vmem [resolvable:$true] %s18
      %21 = dma.hbm_to_vmem [thread:$0]  %s0, 128, %s19, [#allocation3]
    $region5: #{tpu_custom_call.1} parent=1 // pred_fallthru
      _
    // Predicated region
    $region6: #{tpu_custom_call.1} parent=1 // pred_check
      _
    $region7: #{tpu_custom_call.1} parent=1 // pred_check_branch
      %23 = sbr.rel (0) target = $region9
    $region8: #{tpu_custom_call.1} parent=1 // pred_region
      %s25 = ssub.s32 512, 512
      %26 = vsyncadd [#allocation6], %s25
      %s27 = sshll.u32 [#allocation5], 4
      %s28 = int_to_ptr.vmem [resolvable:$true] %s27
      %33 = dma.hbm_to_vmem [thread:$0]  %s1, 512, %s28, [#allocation6], 128, 128, 8
    $region9: #{tpu_custom_call.1} parent=1 // pred_fallthru
      _
    // Predicated region
    $region10: #{tpu_custom_call.1} parent=1 // pred_check
      _
    $region11: #{tpu_custom_call.1} parent=1 // pred_check_branch
      %35 = sbr.rel (0) target = $region13
    $region12: #{tpu_custom_call.1} parent=1 // pred_region
      %s37 = ssub.s32 2048, 2048
      %38 = vsyncadd [#allocation6], %s37
      %s39 = sshll.u32 [#allocation7], 4
      %s40 = int_to_ptr.vmem [resolvable:$true] %s39
      %45 = dma.hbm_to_vmem [thread:$0]  %s2, 2048, %s40, [#allocation6], 128, 128, 8
    $region13: #{tpu_custom_call.1} parent=1 // pred_fallthru
      _
    // Predicated region
    $region14: #{tpu_custom_call.1} parent=1 // pred_check
      _
    $region15: #{tpu_custom_call.1} parent=1 // pred_check_branch
      %47 = sbr.rel (0) target = $region17
    $region16: #{tpu_custom_call.1} parent=1 // pred_region
      _
    $region17: #{tpu_custom_call.1} parent=1 // pred_fallthru
      _
    // Predicated region
    $region18: #{tpu_custom_call.1} parent=1 // pred_check
      _
    $region19: #{tpu_custom_call.1} parent=1 // pred_check_branch
      %49 = sbr.rel (0) target = $region21
    $region20: #{tpu_custom_call.1} parent=1 // pred_region
      %50 = dma.done [#allocation3], 128
    $region21: #{tpu_custom_call.1} parent=1 // pred_fallthru
      _
    // Predicated region
    $region22: #{tpu_custom_call.1} parent=1 // pred_check
      _
    $region23: #{tpu_custom_call.1} parent=1 // pred_check_branch
      %52 = sbr.rel (0) target = $region25
    $region24: #{tpu_custom_call.1} parent=1 // pred_region
      %53 = dma.done [#allocation6], 512
    $region25: #{tpu_custom_call.1} parent=1 // pred_fallthru
      _
    // Predicated region
    $region26: #{tpu_custom_call.1} parent=1 // pred_check
      _
    $region27: #{tpu_custom_call.1} parent=1 // pred_check_branch
      %55 = sbr.rel (0) target = $region29
    $region28: #{tpu_custom_call.1} parent=1 // pred_region
      %56 = dma.done [#allocation6], 2048
    $region29: #{tpu_custom_call.1} parent=1 // pred_fallthru
      _
    %v57 = vld [vmem:[#allocation2] sm:$0xff]
    %v58 = vlaneseq
    %v59 = vshrl.u32 %v58, 7
    %v60 = vadd.s32 %v59, 8
    %v61 = vadd.s32 %v59, 16
    %v62 = vadd.s32 %v59, 24
    %v63 = vcombine.high %v57, %v57
    %v65 = vunpack.c.l.s4 1966171168
    %v66 = vunpack.c.0.s8 %v65
    %v67 = vlaneseq
    %v68 = vshrl.u32 %v67, 7
    %v69 = vsub.s32 %v66, %v68
    %v70 = vrot.slane %v57, %v69
    %v72 = vunpack.c.l.s4 1966171168
    %v73 = vunpack.c.0.s8 %v72
    %v74 = vlaneseq
    %v75 = vshrl.u32 %v74, 7
    %v76 = vsub.s32 %v73, %v75
    %v77 = vrot.slane %v63, %v76
    %v78 = vcombine.high %v70, %v70
    %v79 = vcombine.high %v77, %v77
    %v81 = vunpack.c.l.s4 1966171168
    %v82 = vunpack.c.0.s8 %v81
    %v83 = vlaneseq
    %v84 = vshrl.u32 %v83, 7
    %v85 = vsub.s32 %v82, %v84
    %v86 = vrot.slane %v70, %v85
    %v88 = vunpack.c.l.s4 1966171168
    %v89 = vunpack.c.0.s8 %v88
    %v90 = vlaneseq
    %v91 = vshrl.u32 %v90, 7
    %v92 = vsub.s32 %v89, %v91
    %v93 = vrot.slane %v77, %v92
    %v95 = vunpack.c.l.s4 1966171168
    %v96 = vunpack.c.0.s8 %v95
    %v97 = vlaneseq
    %v98 = vshrl.u32 %v97, 7
    %v99 = vsub.s32 %v96, %v98
    %v100 = vrot.slane %v78, %v99
    %v102 = vunpack.c.l.s4 1966171168
    %v103 = vunpack.c.0.s8 %v102
    %v104 = vlaneseq
    %v105 = vshrl.u32 %v104, 7
    %v106 = vsub.s32 %v103, %v105
    %v107 = vrot.slane %v79, %v106
    %v108 = vcombine.high %v86, %v86
    %v109 = vcombine.high %v93, %v93
    %v110 = vcombine.high %v100, %v100
    %v111 = vcombine.high %v107, %v107
    %v112 = vlaneseq
    %v113 = vshrl.u32 %v112, 7
    %v114 = vsub.s32 0, %v113
    %v115 = vrot.slane %v86, %v114
    %v116 = vlaneseq
    %v117 = vshrl.u32 %v116, 7
    %v118 = vsub.s32 0, %v117
    %v119 = vrot.slane %v100, %v118
    %v120 = vlaneseq
    %v121 = vshrl.u32 %v120, 7
    %v122 = vsub.s32 0, %v121
    %v123 = vrot.slane %v108, %v122
    %v124 = vlaneseq
    %v125 = vshrl.u32 %v124, 7
    %v126 = vsub.s32 0, %v125
    %v127 = vrot.slane %v110, %v126
    %v128 = vlaneseq
    %v129 = vshrl.u32 %v128, 7
    %v130 = vsub.s32 0, %v129
    %v131 = vrot.slane %v93, %v130
    %v132 = vlaneseq
    %v133 = vshrl.u32 %v132, 7
    %v134 = vsub.s32 0, %v133
    %v135 = vrot.slane %v107, %v134
    %v136 = vlaneseq
    %v137 = vshrl.u32 %v136, 7
    %v138 = vsub.s32 0, %v137
    %v139 = vrot.slane %v109, %v138
    %v140 = vlaneseq
    %v141 = vshrl.u32 %v140, 7
    %v142 = vsub.s32 0, %v141
    %v143 = vrot.slane %v111, %v142
    %vm144 = vcmp.eq.s32.totalorder %v115, %v59
    %vm145 = vcmp.eq.s32.totalorder %v115, %v60
    %vm146 = vcmp.eq.s32.totalorder %v115, %v61
    %vm147 = vcmp.eq.s32.totalorder %v115, %v62
    %vm148 = vcmp.eq.s32.totalorder %v119, %v59
    %vm149 = vcmp.eq.s32.totalorder %v119, %v60
    %vm150 = vcmp.eq.s32.totalorder %v119, %v61
    %vm151 = vcmp.eq.s32.totalorder %v119, %v62
    %vm152 = vcmp.eq.s32.totalorder %v123, %v59
    %vm153 = vcmp.eq.s32.totalorder %v123, %v60
    %vm154 = vcmp.eq.s32.totalorder %v123, %v61
    %vm155 = vcmp.eq.s32.totalorder %v123, %v62
    %vm156 = vcmp.eq.s32.totalorder %v127, %v59
    %vm157 = vcmp.eq.s32.totalorder %v127, %v60
    %vm158 = vcmp.eq.s32.totalorder %v127, %v61
    %vm159 = vcmp.eq.s32.totalorder %v127, %v62
    %vm160 = vcmp.eq.s32.totalorder %v131, %v59
    %vm161 = vcmp.eq.s32.totalorder %v131, %v60
    %vm162 = vcmp.eq.s32.totalorder %v131, %v61
    %vm163 = vcmp.eq.s32.totalorder %v131, %v62
    %vm164 = vcmp.eq.s32.totalorder %v135, %v59
    %vm165 = vcmp.eq.s32.totalorder %v135, %v60
    %vm166 = vcmp.eq.s32.totalorder %v135, %v61
    %vm167 = vcmp.eq.s32.totalorder %v135, %v62
    %vm168 = vcmp.eq.s32.totalorder %v139, %v59
    %vm169 = vcmp.eq.s32.totalorder %v139, %v60
    %vm170 = vcmp.eq.s32.totalorder %v139, %v61
    %vm171 = vcmp.eq.s32.totalorder %v139, %v62
    %vm172 = vcmp.eq.s32.totalorder %v143, %v59
    %vm173 = vcmp.eq.s32.totalorder %v143, %v60
    %vm174 = vcmp.eq.s32.totalorder %v143, %v61
    %vm175 = vcmp.eq.s32.totalorder %v143, %v62
    %v176 = vsel %vm144, 1, 0
    %v177 = vsel %vm145, 1, 0
    %v178 = vsel %vm146, 1, 0
    %v179 = vsel %vm147, 1, 0
    %v180 = vsel %vm148, 1, 0
    %v181 = vsel %vm149, 1, 0
    %v182 = vsel %vm150, 1, 0
    %v183 = vsel %vm151, 1, 0
    %v184 = vsel %vm152, 1, 0
    %v185 = vsel %vm153, 1, 0
    %v186 = vsel %vm154, 1, 0
    %v187 = vsel %vm155, 1, 0
    %v188 = vsel %vm156, 1, 0
    %v189 = vsel %vm157, 1, 0
    %v190 = vsel %vm158, 1, 0
    %v191 = vsel %vm159, 1, 0
    %v192 = vsel %vm160, 1, 0
    %v193 = vsel %vm161, 1, 0
    %v194 = vsel %vm162, 1, 0
    %v195 = vsel %vm163, 1, 0
    %v196 = vsel %vm164, 1, 0
    %v197 = vsel %vm165, 1, 0
    %v198 = vsel %vm166, 1, 0
    %v199 = vsel %vm167, 1, 0
    %v200 = vsel %vm168, 1, 0
    %v201 = vsel %vm169, 1, 0
    %v202 = vsel %vm170, 1, 0
    %v203 = vsel %vm171, 1, 0
    %v204 = vsel %vm172, 1, 0
    %v205 = vsel %vm173, 1, 0
    %v206 = vsel %vm174, 1, 0
    %v207 = vsel %vm175, 1, 0
    %v208 = vcvt.s32.f32 %v176
    %v209 = vcvt.s32.f32 %v177
    %v210 = vcvt.s32.f32 %v178
    %v211 = vcvt.s32.f32 %v179
    %v212 = vcvt.s32.f32 %v180
    %v213 = vcvt.s32.f32 %v181
    %v214 = vcvt.s32.f32 %v182
    %v215 = vcvt.s32.f32 %v183
    %v216 = vcvt.s32.f32 %v184
    %v217 = vcvt.s32.f32 %v185
    %v218 = vcvt.s32.f32 %v186
    %v219 = vcvt.s32.f32 %v187
    %v220 = vcvt.s32.f32 %v188
    %v221 = vcvt.s32.f32 %v189
    %v222 = vcvt.s32.f32 %v190
    %v223 = vcvt.s32.f32 %v191
    %v224 = vcvt.s32.f32 %v192
    %v225 = vcvt.s32.f32 %v193
    %v226 = vcvt.s32.f32 %v194
    %v227 = vcvt.s32.f32 %v195
    %v228 = vcvt.s32.f32 %v196
    %v229 = vcvt.s32.f32 %v197
    %v230 = vcvt.s32.f32 %v198
    %v231 = vcvt.s32.f32 %v199
    %v232 = vcvt.s32.f32 %v200
    %v233 = vcvt.s32.f32 %v201
    %v234 = vcvt.s32.f32 %v202
    %v235 = vcvt.s32.f32 %v203
    %v236 = vcvt.s32.f32 %v204
    %v237 = vcvt.s32.f32 %v205
    %v238 = vcvt.s32.f32 %v206
    %v239 = vcvt.s32.f32 %v207
    %vm240 = vcmask 64512
    %v241 = vsel %vm240, %v208, 0.0
    %242 = vadd.xlane.f32.xlu0 %v241
    %v243 = vpop.xlane.xlu0 %242
    %v244 = vsel %vm240, %v209, 0.0
    %245 = vadd.xlane.f32.xlu0 %v244
    %v246 = vpop.xlane.xlu0 %245
    %v247 = vsel %vm240, %v210, 0.0
    %248 = vadd.xlane.f32.xlu0 %v247
    %v249 = vpop.xlane.xlu0 %248
    %v250 = vsel %vm240, %v211, 0.0
    %251 = vadd.xlane.f32.xlu0 %v250
    %v252 = vpop.xlane.xlu0 %251
    %v253 = vsel %vm240, %v212, 0.0
    %254 = vadd.xlane.f32.xlu0 %v253
    %v255 = vpop.xlane.xlu0 %254
    %v256 = vsel %vm240, %v213, 0.0
    %257 = vadd.xlane.f32.xlu0 %v256
    %v258 = vpop.xlane.xlu0 %257
    %v259 = vsel %vm240, %v214, 0.0
    %260 = vadd.xlane.f32.xlu0 %v259
    %v261 = vpop.xlane.xlu0 %260
    %v262 = vsel %vm240, %v215, 0.0
    %263 = vadd.xlane.f32.xlu0 %v262
    %v264 = vpop.xlane.xlu0 %263
    %v265 = vsel %vm240, %v216, 0.0
    %266 = vadd.xlane.f32.xlu0 %v265
    %v267 = vpop.xlane.xlu0 %266
    %v268 = vsel %vm240, %v217, 0.0
    %269 = vadd.xlane.f32.xlu0 %v268
    %v270 = vpop.xlane.xlu0 %269
    %v271 = vsel %vm240, %v218, 0.0
    %272 = vadd.xlane.f32.xlu0 %v271
    %v273 = vpop.xlane.xlu0 %272
    %v274 = vsel %vm240, %v219, 0.0
    %275 = vadd.xlane.f32.xlu0 %v274
    %v276 = vpop.xlane.xlu0 %275
    %v277 = vsel %vm240, %v220, 0.0
    %278 = vadd.xlane.f32.xlu0 %v277
    %v279 = vpop.xlane.xlu0 %278
    %v280 = vsel %vm240, %v221, 0.0
    %281 = vadd.xlane.f32.xlu0 %v280
    %v282 = vpop.xlane.xlu0 %281
    %v283 = vsel %vm240, %v222, 0.0
    %284 = vadd.xlane.f32.xlu0 %v283
    %v285 = vpop.xlane.xlu0 %284
    %v286 = vsel %vm240, %v223, 0.0
    %287 = vadd.xlane.f32.xlu0 %v286
    %v288 = vpop.xlane.xlu0 %287
    %v289 = vsel %vm240, %v224, 0.0
    %290 = vadd.xlane.f32.xlu0 %v289
    %v291 = vpop.xlane.xlu0 %290
    %v292 = vsel %vm240, %v225, 0.0
    %293 = vadd.xlane.f32.xlu0 %v292
    %v294 = vpop.xlane.xlu0 %293
    %v295 = vsel %vm240, %v226, 0.0
    %296 = vadd.xlane.f32.xlu0 %v295
    %v297 = vpop.xlane.xlu0 %296
    %v298 = vsel %vm240, %v227, 0.0
    %299 = vadd.xlane.f32.xlu0 %v298
    %v300 = vpop.xlane.xlu0 %299
    %v301 = vsel %vm240, %v228, 0.0
    %302 = vadd.xlane.f32.xlu0 %v301
    %v303 = vpop.xlane.xlu0 %302
    %v304 = vsel %vm240, %v229, 0.0
    %305 = vadd.xlane.f32.xlu0 %v304
    %v306 = vpop.xlane.xlu0 %305
    %v307 = vsel %vm240, %v230, 0.0
    %308 = vadd.xlane.f32.xlu0 %v307
    %v309 = vpop.xlane.xlu0 %308
    %v310 = vsel %vm240, %v231, 0.0
    %311 = vadd.xlane.f32.xlu0 %v310
    %v312 = vpop.xlane.xlu0 %311
    %v313 = vsel %vm240, %v232, 0.0
    %314 = vadd.xlane.f32.xlu0 %v313
    %v315 = vpop.xlane.xlu0 %314
    %v316 = vsel %vm240, %v233, 0.0
    %317 = vadd.xlane.f32.xlu0 %v316
    %v318 = vpop.xlane.xlu0 %317
    %v319 = vsel %vm240, %v234, 0.0
    %320 = vadd.xlane.f32.xlu0 %v319
    %v321 = vpop.xlane.xlu0 %320
    %v322 = vsel %vm240, %v235, 0.0
    %323 = vadd.xlane.f32.xlu0 %v322
    %v324 = vpop.xlane.xlu0 %323
    %v325 = vsel %vm240, %v236, 0.0
    %326 = vadd.xlane.f32.xlu0 %v325
    %v327 = vpop.xlane.xlu0 %326
    %v328 = vsel %vm240, %v237, 0.0
    %329 = vadd.xlane.f32.xlu0 %v328
    %v330 = vpop.xlane.xlu0 %329
    %v331 = vsel %vm240, %v238, 0.0
    %332 = vadd.xlane.f32.xlu0 %v331
    %v333 = vpop.xlane.xlu0 %332
    %v334 = vsel %vm240, %v239, 0.0
    %335 = vadd.xlane.f32.xlu0 %v334
    %v336 = vpop.xlane.xlu0 %335
    %v337 = vmul.f32 %v243, 0.125
    %v338 = vmul.f32 %v246, 0.125
    %v339 = vmul.f32 %v249, 0.125
    %v340 = vmul.f32 %v252, 0.125
    %v341 = vmul.f32 %v255, 0.125
    %v342 = vmul.f32 %v258, 0.125
    %v343 = vmul.f32 %v261, 0.125
    %v344 = vmul.f32 %v264, 0.125
    %v345 = vmul.f32 %v267, 0.125
    %v346 = vmul.f32 %v270, 0.125
    %v347 = vmul.f32 %v273, 0.125
    %v348 = vmul.f32 %v276, 0.125
    %v349 = vmul.f32 %v279, 0.125
    %v350 = vmul.f32 %v282, 0.125
    %v351 = vmul.f32 %v285, 0.125
    %v352 = vmul.f32 %v288, 0.125
    %v353 = vmul.f32 %v291, 0.125
    %v354 = vmul.f32 %v294, 0.125
    %v355 = vmul.f32 %v297, 0.125
    %v356 = vmul.f32 %v300, 0.125
    %v357 = vmul.f32 %v303, 0.125
    %v358 = vmul.f32 %v306, 0.125
    %v359 = vmul.f32 %v309, 0.125
    %v360 = vmul.f32 %v312, 0.125
    %v361 = vmul.f32 %v315, 0.125
    %v362 = vmul.f32 %v318, 0.125
    %v363 = vmul.f32 %v321, 0.125
    %v364 = vmul.f32 %v324, 0.125
    %v365 = vmul.f32 %v327, 0.125
    %v366 = vmul.f32 %v330, 0.125
    %v367 = vmul.f32 %v333, 0.125
    %v368 = vmul.f32 %v336, 0.125
    %v369 = vld [vmem:[#allocation5] sm:$0xff]
    %v370 = vld [vmem:[#allocation5 + $0x8] sm:$0xff]
    %v371 = vld [vmem:[#allocation5 + $0x10] sm:$0xff]
    %v372 = vld [vmem:[#allocation5 + $0x18] sm:$0xff]
    %v405 = vlaneseq
    %v406 = vand.u32 %v405, 127
    %v407 = vlaneseq
    %v408 = vshrl.u32 %v407, 7
    %v409 = vsub.s32 %v406, %v408
    %v410 = vrot.slane %v337, %v409
    %v411 = vadd.s32 %v406, 4294967288
    %v412 = vlaneseq
    %v413 = vshrl.u32 %v412, 7
    %v414 = vsub.s32 %v411, %v413
    %v415 = vrot.slane %v338, %v414
    %vm416 = vcmask 130112
    %v417 = vsel %vm416, %v415, %v410
    %v418 = vadd.s32 %v406, 4294967280
    %v419 = vlaneseq
    %v420 = vshrl.u32 %v419, 7
    %v421 = vsub.s32 %v418, %v420
    %v422 = vrot.slane %v339, %v421
    %vm423 = vcmask 195712
    %v424 = vsel %vm423, %v422, %v417
    %v425 = vadd.s32 %v406, 4294967272
    %v426 = vlaneseq
    %v427 = vshrl.u32 %v426, 7
    %v428 = vsub.s32 %v425, %v427
    %v429 = vrot.slane %v340, %v428
    %vm430 = vcmask 261312
    %v431 = vsel %vm430, %v429, %v424
    %v432 = vlaneseq
    %v433 = vshrl.u32 %v432, 7
    %v434 = vsub.s32 %v406, %v433
    %v435 = vrot.slane %v341, %v434
    %v436 = vlaneseq
    %v437 = vshrl.u32 %v436, 7
    %v438 = vsub.s32 %v411, %v437
    %v439 = vrot.slane %v342, %v438
    %v440 = vsel %vm416, %v439, %v435
    %v441 = vlaneseq
    %v442 = vshrl.u32 %v441, 7
    %v443 = vsub.s32 %v418, %v442
    %v444 = vrot.slane %v343, %v443
    %v445 = vsel %vm423, %v444, %v440
    %v446 = vlaneseq
    %v447 = vshrl.u32 %v446, 7
    %v448 = vsub.s32 %v425, %v447
    %v449 = vrot.slane %v344, %v448
    %v450 = vsel %vm430, %v449, %v445
    %v451 = vlaneseq
    %v452 = vshrl.u32 %v451, 7
    %v453 = vsub.s32 %v406, %v452
    %v454 = vrot.slane %v345, %v453
    %v455 = vlaneseq
    %v456 = vshrl.u32 %v455, 7
    %v457 = vsub.s32 %v411, %v456
    %v458 = vrot.slane %v346, %v457
    %v459 = vsel %vm416, %v458, %v454
    %v460 = vlaneseq
    %v461 = vshrl.u32 %v460, 7
    %v462 = vsub.s32 %v418, %v461
    %v463 = vrot.slane %v347, %v462
    %v464 = vsel %vm423, %v463, %v459
    %v465 = vlaneseq
    %v466 = vshrl.u32 %v465, 7
    %v467 = vsub.s32 %v425, %v466
    %v468 = vrot.slane %v348, %v467
    %v469 = vsel %vm430, %v468, %v464
    %v470 = vlaneseq
    %v471 = vshrl.u32 %v470, 7
    %v472 = vsub.s32 %v406, %v471
    %v473 = vrot.slane %v349, %v472
    %v474 = vlaneseq
    %v475 = vshrl.u32 %v474, 7
    %v476 = vsub.s32 %v411, %v475
    %v477 = vrot.slane %v350, %v476
    %v478 = vsel %vm416, %v477, %v473
    %v479 = vlaneseq
    %v480 = vshrl.u32 %v479, 7
    %v481 = vsub.s32 %v418, %v480
    %v482 = vrot.slane %v351, %v481
    %v483 = vsel %vm423, %v482, %v478
    %v484 = vlaneseq
    %v485 = vshrl.u32 %v484, 7
    %v486 = vsub.s32 %v425, %v485
    %v487 = vrot.slane %v352, %v486
    %v488 = vsel %vm430, %v487, %v483
    %v489 = vlaneseq
    %v490 = vshrl.u32 %v489, 7
    %v491 = vsub.s32 %v406, %v490
    %v492 = vrot.slane %v353, %v491
    %v493 = vlaneseq
    %v494 = vshrl.u32 %v493, 7
    %v495 = vsub.s32 %v411, %v494
    %v496 = vrot.slane %v354, %v495
    %v497 = vsel %vm416, %v496, %v492
    %v498 = vlaneseq
    %v499 = vshrl.u32 %v498, 7
    %v500 = vsub.s32 %v418, %v499
    %v501 = vrot.slane %v355, %v500
    %v502 = vsel %vm423, %v501, %v497
    %v503 = vlaneseq
    %v504 = vshrl.u32 %v503, 7
    %v505 = vsub.s32 %v425, %v504
    %v506 = vrot.slane %v356, %v505
    %v507 = vsel %vm430, %v506, %v502
    %v508 = vlaneseq
    %v509 = vshrl.u32 %v508, 7
    %v510 = vsub.s32 %v406, %v509
    %v511 = vrot.slane %v357, %v510
    %v512 = vlaneseq
    %v513 = vshrl.u32 %v512, 7
    %v514 = vsub.s32 %v411, %v513
    %v515 = vrot.slane %v358, %v514
    %v516 = vsel %vm416, %v515, %v511
    %v517 = vlaneseq
    %v518 = vshrl.u32 %v517, 7
    %v519 = vsub.s32 %v418, %v518
    %v520 = vrot.slane %v359, %v519
    %v521 = vsel %vm423, %v520, %v516
    %v522 = vlaneseq
    %v523 = vshrl.u32 %v522, 7
    %v524 = vsub.s32 %v425, %v523
    %v525 = vrot.slane %v360, %v524
    %v526 = vsel %vm430, %v525, %v521
    %v527 = vlaneseq
    %v528 = vshrl.u32 %v527, 7
    %v529 = vsub.s32 %v406, %v528
    %v530 = vrot.slane %v361, %v529
    %v531 = vlaneseq
    %v532 = vshrl.u32 %v531, 7
    %v533 = vsub.s32 %v411, %v532
    %v534 = vrot.slane %v362, %v533
    %v535 = vsel %vm416, %v534, %v530
    %v536 = vlaneseq
    %v537 = vshrl.u32 %v536, 7
    %v538 = vsub.s32 %v418, %v537
    %v539 = vrot.slane %v363, %v538
    %v540 = vsel %vm423, %v539, %v535
    %v541 = vlaneseq
    %v542 = vshrl.u32 %v541, 7
    %v543 = vsub.s32 %v425, %v542
    %v544 = vrot.slane %v364, %v543
    %v545 = vsel %vm430, %v544, %v540
    %v546 = vlaneseq
    %v547 = vshrl.u32 %v546, 7
    %v548 = vsub.s32 %v406, %v547
    %v549 = vrot.slane %v365, %v548
    %v550 = vlaneseq
    %v551 = vshrl.u32 %v550, 7
    %v552 = vsub.s32 %v411, %v551
    %v553 = vrot.slane %v366, %v552
    %v554 = vsel %vm416, %v553, %v549
    %v555 = vlaneseq
    %v556 = vshrl.u32 %v555, 7
    %v557 = vsub.s32 %v418, %v556
    %v558 = vrot.slane %v367, %v557
    %v559 = vsel %vm423, %v558, %v554
    %v560 = vlaneseq
    %v561 = vshrl.u32 %v560, 7
    %v562 = vsub.s32 %v425, %v561
    %v563 = vrot.slane %v368, %v562
    %v564 = vsel %vm430, %v563, %v559
    %vm565 = vcmask 1041409
    %v566 = vsel %vm565, %v450, %v431
    %vm567 = vcmask 1042434
    %v568 = vsel %vm567, %v469, %v566
    %vm569 = vcmask 1043459
    %v570 = vsel %vm569, %v488, %v568
    %vm571 = vcmask 1044484
    %v572 = vsel %vm571, %v507, %v570
    %vm573 = vcmask 1045509
    %v574 = vsel %vm573, %v526, %v572
    %vm575 = vcmask 1046534
    %v576 = vsel %vm575, %v545, %v574
    %vm577 = vcmask 1047559
    %v578 = vsel %vm577, %v564, %v576
    %vm579 = vcmask 261120
    %v580 = vsel %vm579, %v578, 0
    %582 = vmatprep.subr.mxu0 0.0
    %583 = vmatpush1.msra.mxu0 %v369
    %584 = vmatprep.subr.mxu0 0.0
    %585 = vmatpush1.msra.mxu0 %v370
    %586 = vmatprep.subr.mxu0 0.0
    %587 = vmatpush1.msra.mxu0 %v371
    %588 = vmatprep.subr.mxu0 0.0
    %589 = vmatpush1.msra.mxu0 %v372
    %590 = vmatprep.subr.mxu0 0.0
    %591 = vmatpush1.msra.mxu0 0.0
    %592 = vmatprep.subr.mxu0 0.0
    %593 = vmatpush1.msra.mxu0 0.0
    %594 = vmatprep.subr.mxu0 0.0
    %595 = vmatpush1.msra.mxu0 0.0
    %596 = vmatprep.subr.mxu0 0.0
    %597 = vmatpush1.msra.mxu0 0.0
    %598 = vmatprep.subr.mxu0 0.0
    %599 = vmatpush1.msra.mxu0 0.0
    %600 = vmatprep.subr.mxu0 0.0
    %601 = vmatpush1.msra.mxu0 0.0
    %602 = vmatprep.subr.mxu0 0.0
    %603 = vmatpush1.msra.mxu0 0.0
    %604 = vmatprep.subr.mxu0 0.0
    %605 = vmatpush1.msra.mxu0 0.0
    %606 = vmatprep.subr.mxu0 0.0
    %607 = vmatpush1.msra.mxu0 0.0
    %608 = vmatprep.subr.mxu0 0.0
    %609 = vmatpush1.msra.mxu0 0.0
    %610 = vmatprep.subr.mxu0 0.0
    %611 = vmatpush1.msra.mxu0 0.0
    %612 = vmatprep.subr.mxu0 0.0
    %613 = vmatpush1.msra.mxu0 0.0
    %614 = vmatprep.subr.mxu0 0.0
    %615 = vmatpush1.msra.mxu0 0.0
    %616 = vmatprep.subr.mxu0 0.0
    %617 = vmatpush1.msra.mxu0 0.0
    %618 = vmatprep.subr.mxu0 0.0
    %619 = vmatpush1.msra.mxu0 0.0
    %620 = vmatprep.subr.mxu0 0.0
    %621 = vmatpush1.msra.mxu0 0.0
    %622 = vmatprep.subr.mxu0 0.0
    %623 = vmatpush1.msra.mxu0 0.0
    %624 = vmatprep.subr.mxu0 0.0
    %625 = vmatpush1.msra.mxu0 0.0
    %626 = vmatprep.subr.mxu0 0.0
    %627 = vmatpush1.msra.mxu0 0.0
    %628 = vmatprep.subr.mxu0 0.0
    %629 = vmatpush1.msra.mxu0 0.0
    %630 = vmatprep.subr.mxu0 0.0
    %631 = vmatpush1.msra.mxu0 0.0
    %632 = vmatprep.subr.mxu0 0.0
    %633 = vmatpush1.msra.mxu0 0.0
    %634 = vmatprep.subr.mxu0 0.0
    %635 = vmatpush1.msra.mxu0 0.0
    %636 = vmatprep.subr.mxu0 0.0
    %637 = vmatpush1.msra.mxu0 0.0
    %638 = vmatprep.subr.mxu0 0.0
    %639 = vmatpush1.msra.mxu0 0.0
    %640 = vmatprep.subr.mxu0 0.0
    %641 = vmatpush1.msra.mxu0 0.0
    %642 = vmatprep.subr.mxu0 0.0
    %643 = vmatpush1.msra.mxu0 0.0
    %644 = vmatprep.subr.mxu0 0.0
    %645 = vmatpush1.msra.mxu0 0.0
    %646 = vmatprep.mubr.f32.mxu0 0.0
    %647 = vmatmul.mubr.f32.gmra.mrb[0].mxu0 %v580
    %v648 = vpop.f32.mrb[0].mxu0
    %v649 = vadd.f32 0.0, %v648
    %v650 = vpop.f32.mrb[0].mxu0
    %651 = vdwg.mxu0
    %v652 = vld [vmem:[#allocation7] sm:$0xff]
    %v653 = vld [vmem:[#allocation7 + $0x8] sm:$0xff]
    %v654 = vld [vmem:[#allocation7 + $0x10] sm:$0xff]
    %v655 = vld [vmem:[#allocation7 + $0x18] sm:$0xff]
    %v656 = vld [vmem:[#allocation7 + $0x20] sm:$0xff]
    %v657 = vld [vmem:[#allocation7 + $0x28] sm:$0xff]
    %v658 = vld [vmem:[#allocation7 + $0x30] sm:$0xff]
    %v659 = vld [vmem:[#allocation7 + $0x38] sm:$0xff]
    %v660 = vld [vmem:[#allocation7 + $0x40] sm:$0xff]
    %v661 = vld [vmem:[#allocation7 + $0x48] sm:$0xff]
    %v662 = vld [vmem:[#allocation7 + $0x50] sm:$0xff]
    %v663 = vld [vmem:[#allocation7 + $0x58] sm:$0xff]
    %v664 = vld [vmem:[#allocation7 + $0x60] sm:$0xff]
    %v665 = vld [vmem:[#allocation7 + $0x68] sm:$0xff]
    %v666 = vld [vmem:[#allocation7 + $0x70] sm:$0xff]
    %v667 = vld [vmem:[#allocation7 + $0x78] sm:$0xff]
    %v668 = vld [vmem:[%s3] sm:$0x1]
    %v670 = vlaneseq
    %v671 = vshrl.u32 %v670, 7
    %v672 = vsub.s32 0, %v671
    %v673 = vrot.slane %v668, %v672
    %675 = vmatprep.subr.mxu0 0.0
    %676 = vmatpush1.msra.mxu0 %v652
    %677 = vmatprep.subr.mxu0 0.0
    %678 = vmatpush1.msra.mxu0 %v653
    %679 = vmatprep.subr.mxu0 0.0
    %680 = vmatpush1.msra.mxu0 %v654
    %681 = vmatprep.subr.mxu0 0.0
    %682 = vmatpush1.msra.mxu0 %v655
    %683 = vmatprep.subr.mxu0 0.0
    %684 = vmatpush1.msra.mxu0 %v656
    %685 = vmatprep.subr.mxu0 0.0
    %686 = vmatpush1.msra.mxu0 %v657
    %687 = vmatprep.subr.mxu0 0.0
    %688 = vmatpush1.msra.mxu0 %v658
    %689 = vmatprep.subr.mxu0 0.0
    %690 = vmatpush1.msra.mxu0 %v659
    %691 = vmatprep.subr.mxu0 0.0
    %692 = vmatpush1.msra.mxu0 %v660
    %693 = vmatprep.subr.mxu0 0.0
    %694 = vmatpush1.msra.mxu0 %v661
    %695 = vmatprep.subr.mxu0 0.0
    %696 = vmatpush1.msra.mxu0 %v662
    %697 = vmatprep.subr.mxu0 0.0
    %698 = vmatpush1.msra.mxu0 %v663
    %699 = vmatprep.subr.mxu0 0.0
    %700 = vmatpush1.msra.mxu0 %v664
    %701 = vmatprep.subr.mxu0 0.0
    %702 = vmatpush1.msra.mxu0 %v665
    %703 = vmatprep.subr.mxu0 0.0
    %704 = vmatpush1.msra.mxu0 %v666
    %705 = vmatprep.subr.mxu0 0.0
    %706 = vmatpush1.msra.mxu0 %v667
    %707 = vmatprep.subr.mxu0 0.0
    %708 = vmatpush1.msra.mxu0 0.0
    %709 = vmatprep.subr.mxu0 0.0
    %710 = vmatpush1.msra.mxu0 0.0
    %711 = vmatprep.subr.mxu0 0.0
    %712 = vmatpush1.msra.mxu0 0.0
    %713 = vmatprep.subr.mxu0 0.0
    %714 = vmatpush1.msra.mxu0 0.0
    %715 = vmatprep.subr.mxu0 0.0
    %716 = vmatpush1.msra.mxu0 0.0
    %717 = vmatprep.subr.mxu0 0.0
    %718 = vmatpush1.msra.mxu0 0.0
    %719 = vmatprep.subr.mxu0 0.0
    %720 = vmatpush1.msra.mxu0 0.0
    %721 = vmatprep.subr.mxu0 0.0
    %722 = vmatpush1.msra.mxu0 0.0
    %723 = vmatprep.subr.mxu0 0.0
    %724 = vmatpush1.msra.mxu0 0.0
    %725 = vmatprep.subr.mxu0 0.0
    %726 = vmatpush1.msra.mxu0 0.0
    %727 = vmatprep.subr.mxu0 0.0
    %728 = vmatpush1.msra.mxu0 0.0
    %729 = vmatprep.subr.mxu0 0.0
    %730 = vmatpush1.msra.mxu0 0.0
    %731 = vmatprep.subr.mxu0 0.0
    %732 = vmatpush1.msra.mxu0 0.0
    %733 = vmatprep.subr.mxu0 0.0
    %734 = vmatpush1.msra.mxu0 0.0
    %735 = vmatprep.subr.mxu0 0.0
    %736 = vmatpush1.msra.mxu0 0.0
    %737 = vmatprep.subr.mxu0 0.0
    %738 = vmatpush1.msra.mxu0 0.0
    %739 = vmatprep.mubr.f32.mxu0 0.0
    %740 = vmatmul.mubr.f32.gmra.mrb[0].mxu0 %v649
    %v741 = vpop.f32.mrb[0].mxu0
    %v742 = vadd.f32 %v673, %v741
    %v743 = vpop.f32.mrb[0].mxu0
    %744 = vdwg.mxu0
    %745 = vst [vmem:[#allocation8] sm:$0xff] %v742
    // Predicated region
    $region30: #{tpu_custom_call.1} parent=1 // pred_check
      _
    $region31: #{tpu_custom_call.1} parent=1 // pred_check_branch
      %747 = sbr.rel (0) target = $region33
    $region32: #{tpu_custom_call.1} parent=1 // pred_region
      %s749 = ssub.s32 128, 128
      %750 = vsyncadd [#allocation4], %s749
      %s752 = sshll.u32 [#allocation8], 4
      %s753 = int_to_ptr.vmem [resolvable:$true] %s752
      %755 = dma.vmem_to_hbm [thread:$0]  %s753, 128, %s4, [#allocation4]
    $region33: #{tpu_custom_call.1} parent=1 // pred_fallthru
      _
    // Predicated region
    $region34: #{tpu_custom_call.1} parent=1 // pred_check
      _
    $region35: #{tpu_custom_call.1} parent=1 // pred_check_branch
      %757 = sbr.rel (0) target = $region37
    $region36: #{tpu_custom_call.1} parent=1 // pred_region
      %758 = dma.done [#allocation4], 128
    $region37: #{tpu_custom_call.1} parent=1 // pred_fallthru
      _
    %759 = vsyncpa [#allocation3], 1
    %760 = vsyncpa [#allocation6], 1
    %761 = vsyncpa [#allocation4], 1

</llo_original>
